<compile_context>
chip_gen: v5e
topology: v5e:2x2
jax: 0.10.0
libtpu: 0.0.40
codegen_flags: <defaults>
</compile_context>

<pallas_src>
import math

import jax
import jax.numpy as jnp
from jax import lax
from jax.experimental import pallas as pl
from jax.experimental.pallas import tpu as pltpu


_TARGET_BLOCK_BYTES = 2 * 1024 * 1024   # ~2 MiB streamed input block per grid step
                                        # (tile sweeps show ~85% of HBM roofline is
                                        # already reached around 1 MiB blocks).


def _pack_factor(H, W):
    """Image rows packed side-by-side along lanes.

    G must divide H.  Prefer G with G*W an exact multiple of 128 (lane-dense,
    unmasked stores); otherwise the largest G with G*W <= 128.
    """
    if W >= 128:
        return 1
    divisors = [g for g in range(1, H + 1) if H % g == 0]
    dense = [g for g in divisors if (g * W) % 128 == 0 and g * W <= 512]
    if dense:
        return min(dense)
    fit = [g for g in divisors if g * W <= 128]
    return max(fit) if fit else 1


def _sizes(R, Hp, L, itemsize):
    """Return (block_rows, chunk_rows, chunks_per_block).

    chunk_rows: whole planes, sublane aligned, ~32 rows so the stencil chain for
    one chunk stays (mostly) vreg-resident.
    block_rows: multiple of chunk_rows, ~_TARGET_BLOCK_BYTES, capped so the grid
    has >= ~4 steps when R permits (megacore sharding + per-core pipelining).
    """
    step = Hp * 8 // math.gcd(Hp, 8)            # lcm(Hp, 8)
    cr = step * max(1, 32 // step)
    if R <= cr:
        return R, R, 1                          # single block == full extent
    target_rows = max(cr, ((_TARGET_BLOCK_BYTES // (L * itemsize)) // cr) * cr)
    cap = max(cr, (R // (4 * cr)) * cr)         # >= ~4 grid steps when possible
    rb = min(target_rows, cap)
    return rb, cr, rb // cr


def _mod(i, m):
    """i % m for a traced non-negative int32 array and a static positive int."""
    if m & (m - 1) == 0:
        return i & (m - 1)
    return i % m


def _roll(x, shift, axis):
    """jnp.roll convention (result[i] = x[i-shift]) via a single XLU rotation."""
    size = x.shape[axis]
    shift = shift % size
    if shift == 0:
        return x
    return pltpu.roll(x, shift, axis=axis)


def _vmem_limit_bytes():
    try:
        return int(pltpu.get_tpu_info().vmem_capacity_bytes * 3 // 4)
    except Exception:
        return None   # fall back to the compiler's scoped default


def _make_kernel(W, G, Hp, L, CR, n_chunks):
    """Kernel over packed blocks (rb, L); L = G*W, each plane owns Hp packed rows.

    CR (chunk rows) is a multiple of both Hp and (when n_chunks > 1) 8, so every
    chunk holds whole planes and sublane rolls never leak across planes (the
    wrapped values land only on rows masked by the h==0 / h==H-1 boundaries).
    """

    def kernel(x_ref, o_ref):
        # --- per-block invariants, hoisted out of the chunk loop -------------
        lane = lax.broadcasted_iota(jnp.int32, (1, L), 1)
        w_idx = _mod(lane, W)
        w_first = w_idx == 0              # image column 0
        w_last = w_idx == W - 1           # image column W-1
        if G > 1:
            seg_first = lane < W          # first image row inside a packed row
            seg_last = lane >= L - W      # last image row inside a packed row
        if Hp > 1:
            hmod = _mod(lax.broadcasted_iota(jnp.int32, (CR, 1), 0), Hp)
            h_first = hmod == 0           # image row 0 of a plane
            h_last = hmod == Hp - 1       # image row H-1 of a plane
        align = CR & (-CR)                # largest power-of-two factor of CR

        def compute(x):
            # x: (CR, L) float32 chunk of whole planes.
            left = jnp.where(w_first, 0.0, _roll(x, 1, axis=1))
            right = jnp.where(w_last, 0.0, _roll(x, -1, axis=1))

            if G == 1:
                if Hp == 1:               # H == 1: no vertical neighbours
                    up = down = None
                else:
                    up = jnp.where(h_first, 0.0, _roll(x, 1, axis=0))
                    down = jnp.where(h_last, 0.0, _roll(x, -1, axis=0))
            else:
                a = _roll(x, W, axis=1)     # image row h-1, same packed row
                b = _roll(x, -W, axis=1)    # image row h+1, same packed row
                if Hp == 1:
                    up = jnp.where(seg_first, 0.0, a)
                    down = jnp.where(seg_last, 0.0, b)
                else:
                    up = jnp.where(seg_first,
                                   jnp.where(h_first, 0.0, _roll(a, 1, axis=0)), a)
                    down = jnp.where(seg_last,
                                     jnp.where(h_last, 0.0, _roll(b, -1, axis=0)), b)

            y = (left + right) - 4.0 * x
            if up is not None:
                y = y + up + down
            return y

        if n_chunks == 1:
            x = x_ref[...].astype(jnp.float32)
            o_ref[...] = compute(x).astype(o_ref.dtype)
        else:
            def chunk(c, carry):
                r0 = pl.multiple_of(c * CR, align)
                x = x_ref[pl.ds(r0, CR), :].astype(jnp.float32)
                o_ref[pl.ds(r0, CR), :] = compute(x).astype(o_ref.dtype)
                return carry

            lax.fori_loop(0, n_chunks, chunk, 0)

    return kernel


def depthwise_laplacian(x):
    """Depthwise 3x3 Laplacian, zero 'same' padding, stride 1, no bias.

    x: (N, C, H, W) float32 -> (N, C, H, W) float32
    """
    N, C, H, W = x.shape
    NC = N * C
    itemsize = jnp.dtype(x.dtype).itemsize

    G = _pack_factor(H, W)      # image rows packed along lanes
    Hp = H // G                 # packed rows per plane
    L = G * W                   # lane extent of a packed row
    R = NC * Hp                 # total packed rows

    # Pure row-major reshape (layout-preserving; no HBM transpose pass).
    xp = x.reshape(R, L)

    rb, cr, n_chunks = _sizes(R, Hp, L, itemsize)
    grid = (pl.cdiv(R, rb),)

    params = dict(dimension_semantics=("parallel",))
    vl = _vmem_limit_bytes()
    if vl is not None:
        params["vmem_limit_bytes"] = vl

    out = pl.pallas_call(
        _make_kernel(W, G, Hp, L, cr, n_chunks),
        out_shape=jax.ShapeDtypeStruct((R, L), x.dtype),
        grid_spec=pltpu.PrefetchScalarGridSpec(
            num_scalar_prefetch=0,
            grid=grid,
            in_specs=[pl.BlockSpec((rb, L), lambda i: (i, 0))],
            out_specs=pl.BlockSpec((rb, L), lambda i: (i, 0)),
        ),
        compiler_params=pltpu.CompilerParams(**params),
        cost_estimate=pl.CostEstimate(
            flops=6 * R * L,
            transcendentals=0,
            bytes_accessed=2 * R * L * itemsize,
        ),
    )(xp)
    return out.reshape(N, C, H, W)


def _reference(x):
    # Pure-JAX reference: depthwise conv with the fixed Laplacian stencil.
    N, C, H, W = x.shape
    k = jnp.array([[0.0, 1.0, 0.0],
                   [1.0, -4.0, 1.0],
                   [0.0, 1.0, 0.0]], dtype=jnp.float32)
    w = jnp.tile(k[:, :, None, None], (1, 1, 1, C))   # HWIO, feature_group_count=C
    return lax.conv_general_dilated(
        x, w, window_strides=(1, 1), padding="SAME",
        dimension_numbers=("NCHW", "HWIO", "NCHW"),
        feature_group_count=C)


if __name__ == "__main__":
    key = jax.random.PRNGKey(0)
    N, C, H, W = 2, 4, 16, 16
    x = jax.random.normal(key, (N, C, H, W), dtype=jnp.float32)

    out = jax.block_until_ready(depthwise_laplacian(x))
    assert out.shape == (N, C, H, W)

    ref = _reference(x)
    assert jnp.allclose(out, ref, atol=1e-5, rtol=1e-5), "mismatch vs reference"
    print("KERNEL_OK")
</pallas_src>

<mosaic_0001>
module attributes {stable_mosaic.version = 11 : i64} {
  func.func @kernel(%arg0: i32, %arg1: memref<16x128xf32, #tpu.memory_space<vmem>>, %arg2: memref<16x128xf32, #tpu.memory_space<vmem>>) attributes {dimension_semantics = [#tpu.dimension_semantics<parallel>], iteration_bounds = array<i64: 1>, scalar_prefetch = 0 : i64, scratch_operands = 0 : i64, tpu.core_type = #tpu.core_type<tc>, window_params = [{transform_indices = @transform_0, window_bounds = array<i64: 16, 128>}, {transform_indices = @transform_1, window_bounds = array<i64: 16, 128>}]} {
    %0 = tpu.iota {dimensions = array<i32: 1>} : vector<1x128xi32>
    %c15_i32 = arith.constant 15 : i32
    %1 = vector.broadcast %c15_i32 : i32 to vector<1x128xi32>
    %2 = arith.andi %0, %1 : vector<1x128xi32>
    %c0_i32 = arith.constant 0 : i32
    %3 = vector.broadcast %c0_i32 : i32 to vector<1x128xi32>
    %4 = arith.cmpi eq, %2, %3 : vector<1x128xi32>
    %c15_i32_0 = arith.constant 15 : i32
    %5 = vector.broadcast %c15_i32_0 : i32 to vector<1x128xi32>
    %6 = arith.cmpi eq, %2, %5 : vector<1x128xi32>
    %c16_i32 = arith.constant 16 : i32
    %7 = vector.broadcast %c16_i32 : i32 to vector<1x128xi32>
    %8 = arith.cmpi slt, %0, %7 : vector<1x128xi32>
    %c112_i32 = arith.constant 112 : i32
    %9 = vector.broadcast %c112_i32 : i32 to vector<1x128xi32>
    %10 = arith.cmpi sge, %0, %9 : vector<1x128xi32>
    %11 = tpu.iota {dimensions = array<i32: 0>} : vector<16x1xi32>
    %c1_i32 = arith.constant 1 : i32
    %12 = vector.broadcast %c1_i32 : i32 to vector<16x1xi32>
    %13 = arith.andi %11, %12 : vector<16x1xi32>
    %c0_i32_1 = arith.constant 0 : i32
    %14 = vector.broadcast %c0_i32_1 : i32 to vector<16x1xi32>
    %15 = arith.cmpi eq, %13, %14 : vector<16x1xi32>
    %c1_i32_2 = arith.constant 1 : i32
    %16 = vector.broadcast %c1_i32_2 : i32 to vector<16x1xi32>
    %17 = arith.cmpi eq, %13, %16 : vector<16x1xi32>
    %c0 = arith.constant 0 : index
    %c0_3 = arith.constant 0 : index
    %18 = vector.load %arg1[%c0, %c0_3] : memref<16x128xf32, #tpu.memory_space<vmem>>, vector<16x128xf32>
    %c1_i32_4 = arith.constant 1 : i32
    %19 = tpu.dynamic_rotate %18 by %c1_i32_4 dim 1 : vector<16x128xf32>, i32 -> vector<16x128xf32>
    %cst = arith.constant 0.000000e+00 : f32
    %20 = vector.shape_cast %4 : vector<1x128xi1> to vector<1x128xi1>
    %21 = vector.broadcast %20 : vector<1x128xi1> to vector<16x128xi1>
    %22 = vector.broadcast %cst : f32 to vector<16x128xf32>
    %23 = arith.select %21, %22, %19 : vector<16x128xi1>, vector<16x128xf32>
    %c127_i32 = arith.constant 127 : i32
    %24 = tpu.dynamic_rotate %18 by %c127_i32 dim 1 : vector<16x128xf32>, i32 -> vector<16x128xf32>
    %cst_5 = arith.constant 0.000000e+00 : f32
    %25 = vector.shape_cast %6 : vector<1x128xi1> to vector<1x128xi1>
    %26 = vector.broadcast %25 : vector<1x128xi1> to vector<16x128xi1>
    %27 = vector.broadcast %cst_5 : f32 to vector<16x128xf32>
    %28 = arith.select %26, %27, %24 : vector<16x128xi1>, vector<16x128xf32>
    %c16_i32_6 = arith.constant 16 : i32
    %29 = tpu.dynamic_rotate %18 by %c16_i32_6 dim 1 : vector<16x128xf32>, i32 -> vector<16x128xf32>
    %c112_i32_7 = arith.constant 112 : i32
    %30 = tpu.dynamic_rotate %18 by %c112_i32_7 dim 1 : vector<16x128xf32>, i32 -> vector<16x128xf32>
    %c1_i32_8 = arith.constant 1 : i32
    %31 = tpu.dynamic_rotate %29 by %c1_i32_8 dim 0 : vector<16x128xf32>, i32 -> vector<16x128xf32>
    %cst_9 = arith.constant 0.000000e+00 : f32
    %32 = vector.shape_cast %15 : vector<16x1xi1> to vector<16x1xi1>
    %33 = vector.broadcast %32 : vector<16x1xi1> to vector<16x128xi1>
    %34 = vector.broadcast %cst_9 : f32 to vector<16x128xf32>
    %35 = arith.select %33, %34, %31 : vector<16x128xi1>, vector<16x128xf32>
    %36 = vector.shape_cast %8 : vector<1x128xi1> to vector<1x128xi1>
    %37 = vector.broadcast %36 : vector<1x128xi1> to vector<16x128xi1>
    %38 = arith.select %37, %35, %29 : vector<16x128xi1>, vector<16x128xf32>
    %c15_i32_10 = arith.constant 15 : i32
    %39 = tpu.dynamic_rotate %30 by %c15_i32_10 dim 0 : vector<16x128xf32>, i32 -> vector<16x128xf32>
    %cst_11 = arith.constant 0.000000e+00 : f32
    %40 = vector.shape_cast %17 : vector<16x1xi1> to vector<16x1xi1>
    %41 = vector.broadcast %40 : vector<16x1xi1> to vector<16x128xi1>
    %42 = vector.broadcast %cst_11 : f32 to vector<16x128xf32>
    %43 = arith.select %41, %42, %39 : vector<16x128xi1>, vector<16x128xf32>
    %44 = vector.shape_cast %10 : vector<1x128xi1> to vector<1x128xi1>
    %45 = vector.broadcast %44 : vector<1x128xi1> to vector<16x128xi1>
    %46 = arith.select %45, %43, %30 : vector<16x128xi1>, vector<16x128xf32>
    %47 = arith.addf %23, %28 : vector<16x128xf32>
    %cst_12 = arith.constant 4.000000e+00 : f32
    %48 = vector.broadcast %cst_12 : f32 to vector<16x128xf32>
    %49 = arith.mulf %48, %18 : vector<16x128xf32>
    %50 = arith.subf %47, %49 : vector<16x128xf32>
    %51 = arith.addf %50, %38 : vector<16x128xf32>
    %52 = arith.addf %51, %46 : vector<16x128xf32>
    %c0_13 = arith.constant 0 : index
    %c0_14 = arith.constant 0 : index
    %53 = vector.load %arg2[%c0_13, %c0_14] : memref<16x128xf32, #tpu.memory_space<vmem>>, vector<16x128xf32>
    tpu.vector_store %arg2[%c0_13, %c0_14], %52 {strides = array<i32>} : memref<16x128xf32, #tpu.memory_space<vmem>>, vector<16x128xf32>,
    return
  }
  func.func @transform_0(%arg0: i32) -> (i32, i32) {
    %c0_i32 = arith.constant 0 : i32
    %c0_i32_0 = arith.constant 0 : i32
    return %arg0, %c0_i32 : i32, i32
  }
  func.func @transform_1(%arg0: i32) -> (i32, i32) {
    %c0_i32 = arith.constant 0 : i32
    %c0_i32_0 = arith.constant 0 : i32
    return %arg0, %c0_i32 : i32, i32
  }
}

</mosaic_0001>

<llo_original>
// kernel: tpu_custom_call.1
$region0: #{tpu_custom_call.1}
  #allocation0 [shape = 'u32[]', space=smem, size = 0x4, offset = 0x4, fixed_abs, tag = 'smem constant byte address 0x4 - core index']
  #allocation1 [shape = 'u32[72,128]{1,0:T(1,128)}', space=vmem, size = 0x9000, scoped, tag = 'internal scratch']
  %s0 = inlined_call_operand.hbm [shape: f32[16,128], index: 0, kind: input, shape index: {}]
  %s1 = inlined_call_operand.hbm [shape: f32[16,128], index: 1, kind: output, shape index: {}]
  %s2 = sld [smem:[#allocation0]]
  $region18: #{tpu_custom_call.1} parent=0
    _
  %s4 = ssub.s32 1, %s2
  %s5 = scalar_select 0, %s4, %s2
  $region1: #{tpu_custom_call.1} parent=0
    #allocation2 [shape = 'u8[8192]{0}', space=vmem, size = 0x2000, scoped, tag = 'input window, operand 0, single buffered']
    #allocation3 [shape = 's32[1]{0}', space=sflag, size = 0x4, scoped, tag = 'scoped memory for tpu_custom_call.1']
    #allocation4 [shape = 's32[1]{0}', space=sflag, size = 0x4, scoped, tag = 'scoped memory for tpu_custom_call.1']
    #allocation5 [shape = 'u8[8192]{0}', space=vmem, size = 0x2000, scoped, tag = 'output window, operand 0, single buffered']
    %6 = vsyncpa [#allocation3], 0
    %7 = vsyncpa [#allocation4], 0
    // Predicated region
    $region2: #{tpu_custom_call.1} parent=1 // pred_check
      _
    $region3: #{tpu_custom_call.1} parent=1 // pred_check_branch
      %9 = sbr.rel (0) target = $region5
    $region4: #{tpu_custom_call.1} parent=1 // pred_region
      %11 = vsyncadd [#allocation3], 0
      %s12 = sshll.u32 %s0, 4
      %s13 = int_to_ptr.hbm [resolvable:$true] %s12
      %s14 = sshll.u32 [#allocation2], 4
      %s15 = int_to_ptr.vmem [resolvable:$true] %s14
      %20 = dma.hbm_to_vmem [thread:$0]  %s13, 256, %s15, [#allocation3], 128, 128, 8
    $region5: #{tpu_custom_call.1} parent=1 // pred_fallthru
      _
    // Predicated region
    $region6: #{tpu_custom_call.1} parent=1 // pred_check
      _
    $region7: #{tpu_custom_call.1} parent=1 // pred_check_branch
      %22 = sbr.rel (0) target = $region9
    $region8: #{tpu_custom_call.1} parent=1 // pred_region
      %24 = dma.done [#allocation3], 256
    $region9: #{tpu_custom_call.1} parent=1 // pred_fallthru
      _
    %v25 = vlaneseq
    %v26 = vand.u32 %v25, 127
    %v27 = vand.u32 %v26, 15
    %vm28 = vcmp.eq.s32.totalorder %v27, 0
    %vm29 = vcmp.eq.s32.totalorder %v27, 15
    %vm30 = vcmp.lt.s32.totalorder %v26, 16
    %vm31 = vcmp.ge.s32.totalorder %v26, 112
    %v32 = vlaneseq
    %v33 = vshrl.u32 %v32, 7
    %v34 = vadd.s32 %v33, 8
    %v35 = vand.u32 %v33, 1
    %v36 = vand.u32 %v34, 1
    %vm37 = vcmp.eq.s32.totalorder %v35, 0
    %vm38 = vcmp.eq.s32.totalorder %v36, 0
    %vm39 = vcmp.eq.s32.totalorder %v35, 1
    %vm40 = vcmp.eq.s32.totalorder %v36, 1
    %v41 = vld [vmem:[#allocation2] sm:$0xff]
    %v42 = vld [vmem:[#allocation2 + $0x8] sm:$0xff]
    %43 = vrot.lane.b32.xlu0 %v41, 1
    %v44 = vpop.permute.xlu0 %43
    %45 = vrot.lane.b32.xlu0 %v42, 1
    %v46 = vpop.permute.xlu0 %45
    %v47 = vsel %vm28, 1, 0
    %vm48 = vcmp.eq.s32.totalorder %v47, 1
    %v49 = vsel %vm48, 0.0, %v44
    %v50 = vsel %vm48, 0.0, %v46
    %51 = vrot.lane.b32.xlu0 %v41, 127
    %v52 = vpop.permute.xlu0 %51
    %53 = vrot.lane.b32.xlu0 %v42, 127
    %v54 = vpop.permute.xlu0 %53
    %v55 = vsel %vm29, 1, 0
    %vm56 = vcmp.eq.s32.totalorder %v55, 1
    %v57 = vsel %vm56, 0.0, %v52
    %v58 = vsel %vm56, 0.0, %v54
    %59 = vrot.lane.b32.xlu0 %v41, 16
    %v60 = vpop.permute.xlu0 %59
    %61 = vrot.lane.b32.xlu0 %v42, 16
    %v62 = vpop.permute.xlu0 %61
    %63 = vrot.lane.b32.xlu0 %v41, 112
    %v64 = vpop.permute.xlu0 %63
    %65 = vrot.lane.b32.xlu0 %v42, 112
    %v66 = vpop.permute.xlu0 %65
    %v67 = vrot.slane %v60, 7
    %v68 = vrot.slane %v62, 7
    %vm69 = vcmp.lt.s32.totalorder %v33, 1
    %v70 = vsel %vm69, %v67, %v68
    %v71 = vsel %vm69, %v68, %v67
    %v72 = vsel %vm37, 1, 0
    %v73 = vsel %vm38, 1, 0
    %vm74 = vcmp.eq.s32.totalorder %v72, 1
    %vm75 = vcmp.eq.s32.totalorder %v73, 1
    %v76 = vsel %vm74, 0.0, %v71
    %v77 = vsel %vm75, 0.0, %v70
    %v78 = vsel %vm30, 1, 0
    %vm79 = vcmp.eq.s32.totalorder %v78, 1
    %v80 = vsel %vm79, %v76, %v60
    %v81 = vsel %vm79, %v77, %v62
    %v82 = vrot.slane %v64, 1
    %v83 = vrot.slane %v66, 1
    %vm84 = vcmp.lt.s32.totalorder %v33, 7
    %v85 = vsel %vm84, %v82, %v83
    %v86 = vsel %vm84, %v83, %v82
    %v87 = vsel %vm39, 1, 0
    %v88 = vsel %vm40, 1, 0
    %vm89 = vcmp.eq.s32.totalorder %v87, 1
    %vm90 = vcmp.eq.s32.totalorder %v88, 1
    %v91 = vsel %vm89, 0.0, %v85
    %v92 = vsel %vm90, 0.0, %v86
    %v93 = vsel %vm31, 1, 0
    %vm94 = vcmp.eq.s32.totalorder %v93, 1
    %v95 = vsel %vm94, %v91, %v64
    %v96 = vsel %vm94, %v92, %v66
    %v97 = vadd.f32 %v49, %v57
    %v98 = vadd.f32 %v50, %v58
    %v99 = vmul.f32 %v41, 4.0
    %v100 = vmul.f32 %v42, 4.0
    %v101 = vsub.f32 %v97, %v99
    %v102 = vsub.f32 %v98, %v100
    %v103 = vadd.f32 %v101, %v80
    %v104 = vadd.f32 %v102, %v81
    %v105 = vadd.f32 %v103, %v95
    %v106 = vadd.f32 %v104, %v96
    %107 = vst [vmem:[#allocation5] sm:$0xff] %v105
    %108 = vst [vmem:[#allocation5 + $0x8] sm:$0xff] %v106
    // Predicated region
    $region10: #{tpu_custom_call.1} parent=1 // pred_check
      _
    $region11: #{tpu_custom_call.1} parent=1 // pred_check_branch
      %110 = sbr.rel (0) target = $region13
    $region12: #{tpu_custom_call.1} parent=1 // pred_region
      %112 = vsyncadd [#allocation4], 0
      %s113 = sshll.u32 [#allocation5], 4
      %s114 = int_to_ptr.vmem [resolvable:$true] %s113
      %s115 = sshll.u32 %s1, 4
      %s116 = int_to_ptr.hbm [resolvable:$true] %s115
      %121 = dma.vmem_to_hbm [thread:$0]  %s114, 256, %s116, [#allocation4], 128, 128, 8
    $region13: #{tpu_custom_call.1} parent=1 // pred_fallthru
      _
    // Predicated region
    $region14: #{tpu_custom_call.1} parent=1 // pred_check
      _
    $region15: #{tpu_custom_call.1} parent=1 // pred_check_branch
      %123 = sbr.rel (0) target = $region17
    $region16: #{tpu_custom_call.1} parent=1 // pred_region
      %125 = dma.done [#allocation4], 256
    $region17: #{tpu_custom_call.1} parent=1 // pred_fallthru
      _
    %126 = vsyncpa [#allocation3], 1
    %127 = vsyncpa [#allocation4], 1

</llo_original>
